<compile_context>
chip_gen: v7x
topology: tpu7x:2x2x1
jax: 0.10.0
libtpu: 0.0.40
codegen_flags: <defaults>
</compile_context>

<pallas_src>
import math
import functools

import jax
import jax.numpy as jnp
from jax.experimental import pallas as pl
from jax.experimental.pallas import tpu as pltpu


# ----------------------------------------------------------------------------
# Tile-size helpers (respect the (8, 128) block constraints and divisibility).
# ----------------------------------------------------------------------------
def _sublane_tile(n, target):
    """Largest multiple-of-8 divisor of n that is <= target (else n itself)."""
    t = min(target, n)
    if t >= n:
        return n
    t = (t // 8) * 8
    while t >= 8:
        if n % t == 0:
            return t
        t -= 8
    return n


def _lane_tile(n, target):
    """Largest multiple-of-128 divisor of n that is <= target (else n)."""
    t = min(target, n)
    if t >= n:
        return n
    t = (t // 128) * 128
    while t >= 128:
        if n % t == 0:
            return t
        t -= 128
    return n


_VMEM_LIMIT = 48 * 1024 * 1024  # safe on v5e/v6e (128 MiB) and v7x (64 MiB)


# ----------------------------------------------------------------------------
# Kernel 1: y = relu(x @ W + b)                       (MMGNN.fcs[0] + act_fn)
# Row-tiled over nodes; weights stay resident in VMEM.
# ----------------------------------------------------------------------------
def _linear_relu_kernel(x_ref, w_ref, b_ref, o_ref):
    y = jnp.dot(x_ref[...], w_ref[...], preferred_element_type=jnp.float32)
    y = y + b_ref[...]
    o_ref[...] = jnp.maximum(y, 0.0)


def linear_relu(x, w, b, *, tm=128):
    N, F = x.shape
    H = w.shape[1]
    tm = _sublane_tile(N, tm)
    return pl.pallas_call(
        _linear_relu_kernel,
        out_shape=jax.ShapeDtypeStruct((N, H), jnp.float32),
        grid=(N // tm,),
        in_specs=[
            pl.BlockSpec((tm, F), lambda i: (i, 0)),
            pl.BlockSpec((F, H), lambda i: (0, 0)),
            pl.BlockSpec((1, H), lambda i: (0, 0)),
        ],
        out_specs=pl.BlockSpec((tm, H), lambda i: (i, 0)),
        compiler_params=pltpu.CompilerParams(dimension_semantics=("parallel",)),
    )(x, w, b.reshape(1, H))


# ----------------------------------------------------------------------------
# Kernel 2: one-time moment aggregation (hoisted out of the layer loop).
#   slab = adj @ [h0, h0^2, ..., h0^moment]   (one wide MXU matmul)
#   then per-chunk: identity / sqrt / signed |.|^(1/order)
# Output: (N, moment*H) slab (lane-dense: moment*H = 128 for H=32, moment=4).
# ----------------------------------------------------------------------------
def _moments_kernel(moment, H, adj_ref, rhs_ref, o_ref, acc_ref):
    k = pl.program_id(1)

    @pl.when(k == 0)
    def _():
        acc_ref[...] = jnp.zeros_like(acc_ref)

    acc_ref[...] += jnp.dot(adj_ref[...], rhs_ref[...],
                            preferred_element_type=jnp.float32)

    @pl.when(k == pl.num_programs(1) - 1)
    def _():
        for m in range(moment):
            order = m + 1
            c = acc_ref[:, m * H:(m + 1) * H]
            if order == 1:
                val = c                                   # mu
            elif order == 2:
                c = jnp.where(c == 0.0, 1e-16, c)
                val = jnp.sqrt(c)                         # sigma
            else:
                c = jnp.where(c == 0.0, 1e-16, c)
                sgn = jnp.where(c < 0.0, -1.0, 1.0)       # signed |gamma|^(1/order)
                a = sgn * c
                if order == 4:
                    r = jnp.sqrt(jnp.sqrt(a))             # cheap EUP form of ^(1/4)
                else:
                    r = jnp.power(a, 1.0 / order)
                val = sgn * r
            o_ref[:, m * H:(m + 1) * H] = val


def moment_aggregation(adj, h0, *, moment=4, tm=128, tk=128):
    N, H = h0.shape
    tm = _sublane_tile(N, tm)
    tk = _lane_tile(N, tk)

    # Build the wide RHS once (cheap O(N * moment * H) glue): h0^1 .. h0^moment,
    # with higher powers built by multiplication (no transcendental pow).
    powers = [h0]
    if moment > 1:
        h0_sq = h0 * h0
        powers.append(h0_sq)
        cur = h0_sq
        for _ in range(3, moment + 1):
            cur = cur * h0
            powers.append(cur)
    rhs = jnp.concatenate(powers, axis=1)                 # (N, moment*H)

    kernel = functools.partial(_moments_kernel, moment, H)
    flops = 2 * N * N * moment * H
    bytes_accessed = 4 * (N * N + 2 * N * moment * H)
    return pl.pallas_call(
        kernel,
        out_shape=jax.ShapeDtypeStruct((N, moment * H), jnp.float32),
        grid=(N // tm, N // tk),
        in_specs=[
            pl.BlockSpec((tm, tk), lambda i, k: (i, k)),           # adj tile
            pl.BlockSpec((tk, moment * H), lambda i, k: (k, 0)),   # wide RHS
        ],
        out_specs=pl.BlockSpec((tm, moment * H), lambda i, k: (i, 0)),
        scratch_shapes=[pltpu.VMEM((tm, moment * H), jnp.float32)],
        compiler_params=pltpu.CompilerParams(
            dimension_semantics=("parallel", "arbitrary"),
            vmem_limit_bytes=_VMEM_LIMIT),
        cost_estimate=pl.CostEstimate(
            flops=flops, transcendentals=2 * N * moment * H,
            bytes_accessed=bytes_accessed),
    )(adj, rhs)


# ----------------------------------------------------------------------------
# Kernel 3: one MMConv layer (only adj @ h remains per layer) + fused ReLU.
#   h_agg = (1-alpha) * adj@h + alpha*h0
#   h_i   = theta * (h_agg @ W) + (1-theta) * h_agg
#   e_m   = elu(moments[m] @ Wk + h_i @ Wq);  attn = softmax over m
#   out   = relu((1-beta) * h_i + beta * sum_m moments[m] * attn_m)
# ----------------------------------------------------------------------------
def _mmconv_kernel(theta, alpha, beta, moment, H,
                   adj_ref, h_ref, h0_ref, mom_ref, w_ref, wk_ref, wq_ref,
                   o_ref, acc_ref):
    k = pl.program_id(1)

    @pl.when(k == 0)
    def _():
        acc_ref[...] = jnp.zeros_like(acc_ref)

    acc_ref[...] += jnp.dot(adj_ref[...], h_ref[...],
                            preferred_element_type=jnp.float32)

    @pl.when(k == pl.num_programs(1) - 1)
    def _():
        h0 = h0_ref[...]
        h_agg = (1.0 - alpha) * acc_ref[...] + alpha * h0
        h_i = theta * jnp.dot(h_agg, w_ref[...],
                              preferred_element_type=jnp.float32) \
            + (1.0 - theta) * h_agg

        # attention over the precomputed moment maps
        q_part = jnp.dot(h_i, wq_ref[...], preferred_element_type=jnp.float32)
        moments = [mom_ref[:, m * H:(m + 1) * H] for m in range(moment)]
        es = []
        for m_val in moments:
            pre = jnp.dot(m_val, wk_ref[...],
                          preferred_element_type=jnp.float32) + q_part
            es.append(jnp.where(pre > 0.0, pre, jnp.exp(pre) - 1.0))  # ELU(1)

        e_max = es[0]
        for e in es[1:]:
            e_max = jnp.maximum(e_max, e)
        exps = [jnp.exp(e - e_max) for e in es]
        denom = exps[0]
        for ex in exps[1:]:
            denom = denom + ex
        inv = pl.reciprocal(denom, approx=True)

        h_m = jnp.zeros_like(h_i)
        for m_val, ex in zip(moments, exps):
            h_m = h_m + m_val * (ex * inv)

        out = (1.0 - beta) * h_i + beta * h_m
        o_ref[...] = jnp.maximum(out, 0.0)        # fused post-conv ReLU


def mmconv(h, adj, h0, mom_slab, weight, w_k, w_q, lamda, alpha, layer_idx,
           *, beta=0.9, moment=4, tm=128, tk=128):
    theta = math.log(lamda / layer_idx + 1.0)
    N, H = h.shape
    tm = _sublane_tile(N, tm)
    tk = _lane_tile(N, tk)
    kernel = functools.partial(_mmconv_kernel, theta, alpha, beta, moment, H)
    flops = 2 * N * N * H + 2 * N * H * H * (2 + moment)
    bytes_accessed = 4 * (N * N + N * H * (4 + moment) + 3 * H * H)
    return pl.pallas_call(
        kernel,
        out_shape=jax.ShapeDtypeStruct((N, H), jnp.float32),
        grid=(N // tm, N // tk),
        in_specs=[
            pl.BlockSpec((tm, tk), lambda i, k: (i, k)),            # adj tile
            pl.BlockSpec((tk, H), lambda i, k: (k, 0)),             # h (RHS)
            pl.BlockSpec((tm, H), lambda i, k: (i, 0)),             # h0 rows
            pl.BlockSpec((tm, moment * H), lambda i, k: (i, 0)),    # moments
            pl.BlockSpec((H, H), lambda i, k: (0, 0)),              # W
            pl.BlockSpec((H, H), lambda i, k: (0, 0)),              # W_att[:H]
            pl.BlockSpec((H, H), lambda i, k: (0, 0)),              # W_att[H:]
        ],
        out_specs=pl.BlockSpec((tm, H), lambda i, k: (i, 0)),
        scratch_shapes=[pltpu.VMEM((tm, H), jnp.float32)],
        compiler_params=pltpu.CompilerParams(
            dimension_semantics=("parallel", "arbitrary"),
            vmem_limit_bytes=_VMEM_LIMIT),
        cost_estimate=pl.CostEstimate(
            flops=flops, transcendentals=(2 * moment + 1) * N * H,
            bytes_accessed=bytes_accessed),
    )(adj, h, h0, mom_slab, weight, w_k, w_q)


# ----------------------------------------------------------------------------
# Kernel 4: final classifier without the residual concat:
#   log_softmax( sum_l h_l @ W2[l*H:(l+1)*H] + b )
# ----------------------------------------------------------------------------
def _classifier_kernel(nlayers, *refs):
    h_refs = refs[:nlayers]
    w_ref = refs[nlayers]
    b_ref = refs[nlayers + 1]
    o_ref = refs[nlayers + 2]

    acc = jnp.dot(h_refs[0][...], w_ref[0],
                  preferred_element_type=jnp.float32)
    for l in range(1, nlayers):
        acc = acc + jnp.dot(h_refs[l][...], w_ref[l],
                            preferred_element_type=jnp.float32)
    y = acc + b_ref[...]
    m = jnp.max(y, axis=-1, keepdims=True)
    z = y - m
    lse = jnp.log(jnp.sum(jnp.exp(z), axis=-1, keepdims=True))
    o_ref[...] = z - lse


def linear_logsoftmax_sum(h_list, w, b, *, tm=128):
    nlayers = len(h_list)
    N, H = h_list[0].shape
    C = w.shape[1]
    tm = _sublane_tile(N, tm)
    w3 = w.reshape(nlayers, H, C)           # row blocks of the concat weight
    kernel = functools.partial(_classifier_kernel, nlayers)
    in_specs = [pl.BlockSpec((tm, H), lambda i: (i, 0)) for _ in range(nlayers)]
    in_specs += [
        pl.BlockSpec((nlayers, H, C), lambda i: (0, 0, 0)),
        pl.BlockSpec((1, C), lambda i: (0, 0)),
    ]
    return pl.pallas_call(
        kernel,
        out_shape=jax.ShapeDtypeStruct((N, C), jnp.float32),
        grid=(N // tm,),
        in_specs=in_specs,
        out_specs=pl.BlockSpec((tm, C), lambda i: (i, 0)),
        compiler_params=pltpu.CompilerParams(dimension_semantics=("parallel",)),
    )(*h_list, w3, b.reshape(1, C))


# ----------------------------------------------------------------------------
# MMGNN forward (use_resnet=True path), dropout = identity (inference)
# ----------------------------------------------------------------------------
def mmgnn_forward(params, x, adj, *, lamda, alpha, nlayers,
                  beta=0.9, moment=4, tm=128, tk=128):
    h = linear_relu(x, params["fc0_w"], params["fc0_b"], tm=tm)   # fcs[0]+ReLU
    h0 = h                                                        # _layers[0]
    H = h0.shape[1]

    # layer-invariant moment statistics, computed once (hoisted)
    mom_slab = moment_aggregation(adj, h0, moment=moment, tm=tm, tk=tk)

    res_list = []
    for ind in range(nlayers):
        w_att = params["conv_watt"][ind]
        w_k, w_q = w_att[:H, :], w_att[H:, :]
        h = mmconv(h, adj, h0, mom_slab, params["conv_w"][ind], w_k, w_q,
                   lamda, alpha, ind + 1, beta=beta, moment=moment,
                   tm=tm, tk=tk)                                  # ReLU fused
        res_list.append(h)

    # residual concat eliminated: sum of per-layer partial matmuls
    return linear_logsoftmax_sum(res_list, params["fc1_w"], params["fc1_b"],
                                 tm=tm)


# ----------------------------------------------------------------------------
# Pure-JAX reference (mirrors the PyTorch module, inference mode)
# ----------------------------------------------------------------------------
def mmgnn_reference(params, x, adj, *, lamda, alpha, nlayers,
                    beta=0.9, moment=4):
    h = jax.nn.relu(x @ params["fc0_w"] + params["fc0_b"])
    h0 = h
    moms = [adj @ h0]
    if moment > 1:
        s = adj @ (h0 ** 2)
        s = jnp.where(s == 0.0, 1e-16, s)
        moms.append(jnp.sqrt(s))
        for order in range(3, moment + 1):
            g = adj @ (h0 ** order)
            g = jnp.where(g == 0.0, 1e-16, g)
            sgn = jnp.where(g < 0.0, -1.0, 1.0)
            moms.append(sgn * jnp.power(sgn * g, 1.0 / order))
    res = []
    for ind in range(nlayers):
        theta = math.log(lamda / (ind + 1) + 1.0)
        W = params["conv_w"][ind]
        Watt = params["conv_watt"][ind]
        h_agg = (1.0 - alpha) * (adj @ h) + alpha * h0
        h_i = theta * (h_agg @ W) + (1.0 - theta) * h_agg
        es = [jax.nn.elu(jnp.concatenate([m, h_i], axis=1) @ Watt)
              for m in moms]
        attn = jax.nn.softmax(jnp.stack(es, axis=0), axis=0)
        h_m = jnp.sum(jnp.stack(moms, axis=0) * attn, axis=0)
        h = jax.nn.relu((1.0 - beta) * h_i + beta * h_m)
        res.append(h)
    residual = jnp.concatenate(res, axis=1)
    logits = residual @ params["fc1_w"] + params["fc1_b"]
    return jax.nn.log_softmax(logits, axis=-1)


# ----------------------------------------------------------------------------
# Deterministic parameter / input construction
# ----------------------------------------------------------------------------
def make_params(key, nfeat, nhidden, n_output, nlayers):
    ks = jax.random.split(key, 4 + 2 * nlayers)
    stdv = 1.0 / math.sqrt(nhidden)
    params = {
        "fc0_w": jax.random.uniform(ks[0], (nfeat, nhidden), jnp.float32, -stdv, stdv),
        "fc0_b": jax.random.uniform(ks[1], (nhidden,), jnp.float32, -stdv, stdv),
        "fc1_w": jax.random.uniform(ks[2], (nhidden * nlayers, n_output),
                                    jnp.float32, -stdv, stdv),
        "fc1_b": jax.random.uniform(ks[3], (n_output,), jnp.float32, -stdv, stdv),
        "conv_w": [],
        "conv_watt": [],
    }
    for i in range(nlayers):
        params["conv_w"].append(
            jax.random.uniform(ks[4 + 2 * i], (nhidden, nhidden),
                               jnp.float32, -stdv, stdv))
        params["conv_watt"].append(
            jax.random.uniform(ks[5 + 2 * i], (2 * nhidden, nhidden),
                               jnp.float32, -stdv, stdv))
    return params


def make_adj(key, n):
    a = jax.random.uniform(key, (n, n), jnp.float32)
    a = (a > 0.9).astype(jnp.float32)
    a = jnp.maximum(a, a.T) + jnp.eye(n, dtype=jnp.float32)   # symmetric + self loops
    d = jnp.sum(a, axis=1)
    dinv = 1.0 / jnp.sqrt(d)
    return a * dinv[:, None] * dinv[None, :]                  # D^-1/2 A D^-1/2


if __name__ == "__main__":
    N, NFEAT, NHIDDEN, NLAYERS, NOUT = 256, 64, 32, 2, 8
    MOMENT = 4
    LAMDA, ALPHA, BETA = 0.5, 0.1, 0.9

    key = jax.random.PRNGKey(0)
    kx, kadj, kp = jax.random.split(key, 3)

    x = jax.random.normal(kx, (N, NFEAT), jnp.float32)
    adj = make_adj(kadj, N)
    params = make_params(kp, NFEAT, NHIDDEN, NOUT, NLAYERS)

    out = mmgnn_forward(params, x, adj, lamda=LAMDA, alpha=ALPHA,
                        nlayers=NLAYERS, beta=BETA, moment=MOMENT,
                        tm=128, tk=128)
    out = jax.block_until_ready(out)

    assert out.shape == (N, NOUT)
    assert bool(jnp.all(jnp.isfinite(out)))
    # rows of log_softmax should exp-sum to 1
    assert bool(jnp.allclose(jnp.sum(jnp.exp(out), axis=1), 1.0, atol=1e-4))

    # compare against a pure-JAX reference of the PyTorch module
    ref = mmgnn_reference(params, x, adj, lamda=LAMDA, alpha=ALPHA,
                          nlayers=NLAYERS, beta=BETA, moment=MOMENT)
    max_diff = float(jnp.max(jnp.abs(out - ref)))
    assert max_diff < 1e-2, f"max diff vs reference too large: {max_diff}"

    print("KERNEL_OK")
</pallas_src>

<mosaic_0001>
module attributes {stable_mosaic.version = 11 : i64} {
  func.func @_linear_relu_kernel(%arg0: i32, %arg1: memref<128x64xf32, #tpu.memory_space<vmem>>, %arg2: memref<64x32xf32, #tpu.memory_space<vmem>>, %arg3: memref<1x32xf32, #tpu.memory_space<vmem>>, %arg4: memref<128x32xf32, #tpu.memory_space<vmem>>) attributes {dimension_semantics = [#tpu.dimension_semantics<parallel>], iteration_bounds = array<i64: 2>, scalar_prefetch = 0 : i64, scratch_operands = 0 : i64, tpu.core_type = #tpu.core_type<tc>, window_params = [{transform_indices = @transform_0, window_bounds = array<i64: 128, 64>}, {pipeline_mode = #tpu.pipeline_mode<synchronous>, transform_indices = @transform_1, window_bounds = array<i64: 64, 32>}, {pipeline_mode = #tpu.pipeline_mode<synchronous>, transform_indices = @transform_2, window_bounds = array<i64: 1, 32>}, {transform_indices = @transform_3, window_bounds = array<i64: 128, 32>}]} {
    %c0 = arith.constant 0 : index
    %c0_0 = arith.constant 0 : index
    %0 = vector.load %arg1[%c0, %c0_0] : memref<128x64xf32, #tpu.memory_space<vmem>>, vector<128x64xf32>
    %c0_1 = arith.constant 0 : index
    %c0_2 = arith.constant 0 : index
    %1 = vector.load %arg2[%c0_1, %c0_2] : memref<64x32xf32, #tpu.memory_space<vmem>>, vector<64x32xf32>
    %cst = arith.constant dense<0.000000e+00> : vector<128x32xf32>
    %2 = tpu.matmul %0, %1, %cst {dimension_numbers = #tpu.dot_dimension_numbers<[1], [0], [0], [1], [0, 0, 1, 1], [], []>} : vector<128x64xf32>, vector<64x32xf32>, vector<128x32xf32> -> vector<128x32xf32>
    %c0_3 = arith.constant 0 : index
    %c0_4 = arith.constant 0 : index
    %3 = vector.load %arg3[%c0_3, %c0_4] : memref<1x32xf32, #tpu.memory_space<vmem>>, vector<1x32xf32>
    %4 = vector.broadcast %3 : vector<1x32xf32> to vector<128x32xf32>
    %5 = arith.addf %2, %4 : vector<128x32xf32>
    %cst_5 = arith.constant 0.000000e+00 : f32
    %6 = vector.broadcast %cst_5 : f32 to vector<128x32xf32>
    %7 = arith.maximumf %5, %6 : vector<128x32xf32>
    %c0_6 = arith.constant 0 : index
    %c0_7 = arith.constant 0 : index
    %8 = vector.load %arg4[%c0_6, %c0_7] : memref<128x32xf32, #tpu.memory_space<vmem>>, vector<128x32xf32>
    tpu.vector_store %arg4[%c0_6, %c0_7], %7 {strides = array<i32>} : memref<128x32xf32, #tpu.memory_space<vmem>>, vector<128x32xf32>,
    return
  }
  func.func @transform_0(%arg0: i32) -> (i32, i32) {
    %c0_i32 = arith.constant 0 : i32
    %c0_i32_0 = arith.constant 0 : i32
    return %arg0, %c0_i32 : i32, i32
  }
  func.func @transform_1(%arg0: i32) -> (i32, i32) {
    %c0_i32 = arith.constant 0 : i32
    %c0_i32_0 = arith.constant 0 : i32
    %c0_i32_1 = arith.constant 0 : i32
    return %c0_i32, %c0_i32_0 : i32, i32
  }
  func.func @transform_2(%arg0: i32) -> (i32, i32) {
    %c0_i32 = arith.constant 0 : i32
    %c0_i32_0 = arith.constant 0 : i32
    %c0_i32_1 = arith.constant 0 : i32
    return %c0_i32, %c0_i32_0 : i32, i32
  }
  func.func @transform_3(%arg0: i32) -> (i32, i32) {
    %c0_i32 = arith.constant 0 : i32
    %c0_i32_0 = arith.constant 0 : i32
    return %arg0, %c0_i32 : i32, i32
  }
}

</mosaic_0001>

<llo_original>
// kernel: tpu_custom_call.1
$region0: #{tpu_custom_call.1}
  #allocation0 [shape = 'u32[]', space=smem, size = 0x4, offset = 0x4, fixed_abs, tag = 'smem constant byte address 0x4 - core index']
  #allocation1 [shape = 'u32[144,128]{1,0:T(1,128)}', space=vmem, size = 0x12000, scoped, tag = 'internal scratch']
  %s0 = inlined_call_operand.vmem [shape: f32[256,64], index: 0, kind: input, shape index: {}]
  %s1 = inlined_call_operand.vmem [shape: f32[64,32], index: 1, kind: input, shape index: {}]
  %s2 = inlined_call_operand.vmem [shape: f32[1,32], index: 2, kind: input, shape index: {}]
  %s3 = inlined_call_operand.vmem [shape: f32[256,32], index: 3, kind: output, shape index: {}]
  %s4 = sld [smem:[#allocation0]]
  $region45: #{tpu_custom_call.1} parent=0
    _
  %s6 = ssub.s32 1, %s4
  %s7 = scalar_select 0, %s6, %s4
  loop: start=0, step=1, limit=4
  $region2: #{tpu_custom_call.1} parent=0 // loop_pre_header
    _
  $region3: #{tpu_custom_call.1} parent=0 // loop_header
    %s9 = sphi 0, %s13
    %p10 = scmp.ge.s32.totalorder %s9, 4
    %s19 = sphi 0, %s21
    %s22 = sphi 0, %s19
    %s23 = sphi 0, %s22
    %s39 = sphi 0, %s23
    %s43 = sphi 0, %s43
    %s45 = sphi 0, %s43
    %s46 = sphi 0, %s45
    %s60 = sphi 0, %s46
    %s64 = sphi 0, %s64
    %s66 = sphi 0, %s64
    %s67 = sphi 0, %s66
    %s81 = sphi 0, %s67
    %s87 = sphi 0, %s89
    %s90 = sphi 0, %s87
    %s91 = sphi 0, %s90
    %s107 = sphi 0, %s91
  $region4: #{tpu_custom_call.1} parent=0 // loop_header_branch
    %12 = sbr.rel (%p10) target = $region8
  $region5: #{tpu_custom_call.1} parent=0 // loop_body
    %s14 = ssub.s32 %s9, 1
    %s15 = ssub.s32 %s9, 2
    %s16 = sadd.s32 %s9, 1
    %s17 = ssub.s32 %s9, %s16
    %p18 = scmp.eq.s32.totalorder %s17, 0
    %s20 = sadd.s32 %s19, 1
    %s21 = scalar_select %p18, %s19, %s20
    %p24 = pneg %p18
    %p25 = scmp.eq.s32.totalorder %s9, 1
    %p26 = por %p24, %p25
    %p27 = scmp.ne.s32.totalorder %s19, %s22
    %p28 = scmp.eq.s32.totalorder %s9, 0
    %p29 = por %p27, %p28
    %p30 = scmp.ne.s32.totalorder %s19, %s22
    %p31 = scmp.eq.s32.totalorder %s14, 1
    %p32 = por %p30, %p31
    %p33 = scmp.ne.s32.totalorder %s22, %s23
    %p34 = scmp.eq.s32.totalorder %s14, 0
    %p35 = por %p33, %p34
    %p36 = scmp.ne.s32.totalorder %s22, %s23
    %p37 = scmp.eq.s32.totalorder %s15, 1
    %p38 = por %p36, %p37
    %p40 = scmp.ne.s32.totalorder %s23, %s39
    %p41 = scmp.eq.s32.totalorder %s15, 0
    %p42 = por %p40, %p41
    %s44 = sadd.s32 %s43, 1
    %p47 = scmp.eq.s32.totalorder %s9, 1
    %p48 = scmp.ne.s32.totalorder %s43, %s45
    %p49 = scmp.eq.s32.totalorder %s9, 0
    %p50 = por %p48, %p49
    %p51 = scmp.ne.s32.totalorder %s43, %s45
    %p52 = scmp.eq.s32.totalorder %s14, 1
    %p53 = por %p51, %p52
    %p54 = scmp.ne.s32.totalorder %s45, %s46
    %p55 = scmp.eq.s32.totalorder %s14, 0
    %p56 = por %p54, %p55
    %p57 = scmp.ne.s32.totalorder %s45, %s46
    %p58 = scmp.eq.s32.totalorder %s15, 1
    %p59 = por %p57, %p58
    %p61 = scmp.ne.s32.totalorder %s46, %s60
    %p62 = scmp.eq.s32.totalorder %s15, 0
    %p63 = por %p61, %p62
    %s65 = sadd.s32 %s64, 1
    %p68 = scmp.eq.s32.totalorder %s9, 1
    %p69 = scmp.ne.s32.totalorder %s64, %s66
    %p70 = scmp.eq.s32.totalorder %s9, 0
    %p71 = por %p69, %p70
    %p72 = scmp.ne.s32.totalorder %s64, %s66
    %p73 = scmp.eq.s32.totalorder %s14, 1
    %p74 = por %p72, %p73
    %p75 = scmp.ne.s32.totalorder %s66, %s67
    %p76 = scmp.eq.s32.totalorder %s14, 0
    %p77 = por %p75, %p76
    %p78 = scmp.ne.s32.totalorder %s66, %s67
    %p79 = scmp.eq.s32.totalorder %s15, 1
    %p80 = por %p78, %p79
    %p82 = scmp.ne.s32.totalorder %s67, %s81
    %p83 = scmp.eq.s32.totalorder %s15, 0
    %p84 = por %p82, %p83
    %s85 = ssub.s32 %s9, %s16
    %p86 = scmp.eq.s32.totalorder %s85, 0
    %s88 = sadd.s32 %s87, 1
    %s89 = scalar_select %p86, %s87, %s88
    %p92 = pneg %p86
    %p93 = scmp.eq.s32.totalorder %s9, 1
    %p94 = por %p92, %p93
    %p95 = scmp.ne.s32.totalorder %s87, %s90
    %p96 = scmp.eq.s32.totalorder %s9, 0
    %p97 = por %p95, %p96
    %p98 = scmp.ne.s32.totalorder %s87, %s90
    %p99 = scmp.eq.s32.totalorder %s14, 1
    %p100 = por %p98, %p99
    %p101 = scmp.ne.s32.totalorder %s90, %s91
    %p102 = scmp.eq.s32.totalorder %s14, 0
    %p103 = por %p101, %p102
    %p104 = scmp.ne.s32.totalorder %s90, %s91
    %p105 = scmp.eq.s32.totalorder %s15, 1
    %p106 = por %p104, %p105
    %p108 = scmp.ne.s32.totalorder %s91, %s107
    %p109 = scmp.eq.s32.totalorder %s15, 0
    %p110 = por %p108, %p109
    %p111 = scmp.le.s32.totalorder 1, %s9
    %p112 = scmp.lt.s32.totalorder %s9, 3
    %p113 = pnand %p111, %p112
    %p114 = pneg %p113
    // Predicated region
    $region9: #{tpu_custom_call.1} parent=5 // pred_check
      _
    $region10: #{tpu_custom_call.1} parent=5 // pred_check_branch
      %116 = sbr.rel (%p113) target = $region12
    $region11: #{tpu_custom_call.1} parent=5 // pred_region
      %s117 = ssub.s32 %s9, 1
      // Predicated region
      $region13: #{tpu_custom_call.1} parent=11 // pred_check
        %p118 = pneg %p56
      $region14: #{tpu_custom_call.1} parent=11 // pred_check_branch
        %120 = sbr.rel (%p118) target = $region16
      $region15: #{tpu_custom_call.1} parent=11 // pred_region
        _
      $region16: #{tpu_custom_call.1} parent=11 // pred_fallthru
        _
      // Predicated region
      $region17: #{tpu_custom_call.1} parent=11 // pred_check
        %p121 = pneg %p77
      $region18: #{tpu_custom_call.1} parent=11 // pred_check_branch
        %123 = sbr.rel (%p121) target = $region20
      $region19: #{tpu_custom_call.1} parent=11 // pred_region
        _
      $region20: #{tpu_custom_call.1} parent=11 // pred_fallthru
        _
    $region12: #{tpu_custom_call.1} parent=5 // pred_fallthru
      _
    %p124 = scmp.lt.s32.totalorder %s9, 2
    // Predicated region
    $region21: #{tpu_custom_call.1} parent=5 // pred_check
      %p125 = pneg %p124
    $region22: #{tpu_custom_call.1} parent=5 // pred_check_branch
      %127 = sbr.rel (%p125) target = $region24
    $region23: #{tpu_custom_call.1} parent=5 // pred_region
      // Predicated region
      $region25: #{tpu_custom_call.1} parent=23 // pred_check
        %p128 = pneg %p29
      $region26: #{tpu_custom_call.1} parent=23 // pred_check_branch
        %130 = sbr.rel (%p128) target = $region28
      $region27: #{tpu_custom_call.1} parent=23 // pred_region
        %s131 = smul.u32 16, %s9
        %p132 = scmp.lt.s32.totalorder %s131, 31
        %s133 = scalar_select %p132, %s131, 31
        %s134 = smul.addr %s133, 8
        %s135 = scalar_lea.vmem %s0, %s134
        %s136 = smul.u32 16, %s9
      $region28: #{tpu_custom_call.1} parent=23 // pred_fallthru
        _
    $region24: #{tpu_custom_call.1} parent=5 // pred_fallthru
      _
    %p137 = scmp.le.s32.totalorder 1, %s9
    %p138 = scmp.lt.s32.totalorder %s9, 3
    %p139 = pnand %p137, %p138
    %p140 = pneg %p139
    // Predicated region
    $region29: #{tpu_custom_call.1} parent=5 // pred_check
      _
    $region30: #{tpu_custom_call.1} parent=5 // pred_check_branch
      %142 = sbr.rel (%p139) target = $region32
    $region31: #{tpu_custom_call.1} parent=5 // pred_region
      %s143 = ssub.s32 %s9, 1
      %s144 = smul.u32 16, %s14
      %p145 = scmp.lt.s32.totalorder %s144, 31
      %s146 = scalar_select %p145, %s144, 31
      %s147 = smul.addr %s146, 8
      %s148 = scalar_lea.vmem %s0, %s147
      %p149 = pneg %p35
      %p150 = pneg %p32
      %p151 = pneg %p56
      %p152 = pneg %p53
      %p153 = pneg %p77
      %p154 = pneg %p74
      %p155 = pneg %p103
      %p156 = pneg %p100
      %s157 = smul.u32 16, %s14
      %p158 = scmp.lt.s32.totalorder %s157, 31
      %s159 = scalar_select %p158, %s157, 31
      %s160 = smul.addr %s159, 8
      %s161 = scalar_lea.vmem %s3, %s160
      %s162 = smul.u32 16, %s14
      %p163 = scmp.lt.s32.totalorder %s162, 31
      %s164 = scalar_select %p163, %s162, 31
      %s165 = smul.addr %s164, 8
      %s166 = scalar_lea.vmem %s0, %s165
      %s167 = smul.u32 16, %s14
      %s168 = smul.u32 16, %s14
      %p169 = scmp.lt.s32.totalorder %s168, 31
      %s170 = scalar_select %p169, %s168, 31
      %s171 = smul.addr %s170, 8
      %s172 = scalar_lea.vmem %s3, %s171
      %s173 = smul.u32 16, %s14
      %v174 = vld [vmem:[%s166] sm:$0xff]
      %v175 = vld [vmem:[%s166 + $0x8] sm:$0xff]
      %v176 = vld [vmem:[%s166 + $0x10] sm:$0xff]
      %v177 = vld [vmem:[%s166 + $0x18] sm:$0xff]
      %v178 = vld [vmem:[%s166 + $0x20] sm:$0xff]
      %v179 = vld [vmem:[%s166 + $0x28] sm:$0xff]
      %v180 = vld [vmem:[%s166 + $0x30] sm:$0xff]
      %v181 = vld [vmem:[%s166 + $0x38] sm:$0xff]
      %v182 = vld [vmem:[%s166 + $0x40] sm:$0xff]
      %v183 = vld [vmem:[%s166 + $0x48] sm:$0xff]
      %v184 = vld [vmem:[%s166 + $0x50] sm:$0xff]
      %v185 = vld [vmem:[%s166 + $0x58] sm:$0xff]
      %v186 = vld [vmem:[%s166 + $0x60] sm:$0xff]
      %v187 = vld [vmem:[%s166 + $0x68] sm:$0xff]
      %v188 = vld [vmem:[%s166 + $0x70] sm:$0xff]
      %v189 = vld [vmem:[%s166 + $0x78] sm:$0xff]
      %v190 = vld [vmem:[%s1] sm:$0xff]
      %v191 = vld [vmem:[%s1 + $0x8] sm:$0xff]
      %v192 = vld [vmem:[%s1 + $0x10] sm:$0xff]
      %v193 = vld [vmem:[%s1 + $0x18] sm:$0xff]
      %v194 = vld [vmem:[%s1 + $0x20] sm:$0xff]
      %v195 = vld [vmem:[%s1 + $0x28] sm:$0xff]
      %v196 = vld [vmem:[%s1 + $0x30] sm:$0xff]
      %v197 = vld [vmem:[%s1 + $0x38] sm:$0xff]
      %v198 = vld [vmem:[%s2] sm:$0x1]
      %v200 = vlaneseq
      %v201 = vshrl.u32 %v200, 7
      %v202 = vsub.s32 0, %v201
      %v203 = vrot.slane %v198, %v202
      %vm205 = vcmask 523264
      %v207 = vsel %vm205, %v174, 0
      %v210 = vsel %vm205, %v175, 0
      %v213 = vsel %vm205, %v176, 0
      %v216 = vsel %vm205, %v177, 0
      %v219 = vsel %vm205, %v178, 0
      %v222 = vsel %vm205, %v179, 0
      %v225 = vsel %vm205, %v180, 0
      %v228 = vsel %vm205, %v181, 0
      %v231 = vsel %vm205, %v182, 0
      %v234 = vsel %vm205, %v183, 0
      %v237 = vsel %vm205, %v184, 0
      %v240 = vsel %vm205, %v185, 0
      %v243 = vsel %vm205, %v186, 0
      %v246 = vsel %vm205, %v187, 0
      %v249 = vsel %vm205, %v188, 0
      %v252 = vsel %vm205, %v189, 0
      %254 = vmatprep.subr.mxu0 0.0
      %255 = vmatpush1.msra.mxu0 %v190
      %256 = vmatprep.subr.mxu0 0.0
      %257 = vmatpush1.msra.mxu0 %v191
      %258 = vmatprep.subr.mxu0 0.0
      %259 = vmatpush1.msra.mxu0 %v192
      %260 = vmatprep.subr.mxu0 0.0
      %261 = vmatpush1.msra.mxu0 %v193
      %262 = vmatprep.subr.mxu0 0.0
      %263 = vmatpush1.msra.mxu0 %v194
      %264 = vmatprep.subr.mxu0 0.0
      %265 = vmatpush1.msra.mxu0 %v195
      %266 = vmatprep.subr.mxu0 0.0
      %267 = vmatpush1.msra.mxu0 %v196
      %268 = vmatprep.subr.mxu0 0.0
      %269 = vmatpush1.msra.mxu0 %v197
      %270 = vmatprep.subr.mxu0 0.0
      %271 = vmatpush1.msra.mxu0 0.0
      %272 = vmatprep.subr.mxu0 0.0
      %273 = vmatpush1.msra.mxu0 0.0
      %274 = vmatprep.subr.mxu0 0.0
      %275 = vmatpush1.msra.mxu0 0.0
      %276 = vmatprep.subr.mxu0 0.0
      %277 = vmatpush1.msra.mxu0 0.0
      %278 = vmatprep.subr.mxu0 0.0
      %279 = vmatpush1.msra.mxu0 0.0
      %280 = vmatprep.subr.mxu0 0.0
      %281 = vmatpush1.msra.mxu0 0.0
      %282 = vmatprep.subr.mxu0 0.0
      %283 = vmatpush1.msra.mxu0 0.0
      %284 = vmatprep.subr.mxu0 0.0
      %285 = vmatpush1.msra.mxu0 0.0
      %286 = vmatprep.subr.mxu0 0.0
      %287 = vmatpush1.msra.mxu0 0.0
      %288 = vmatprep.subr.mxu0 0.0
      %289 = vmatpush1.msra.mxu0 0.0
      %290 = vmatprep.subr.mxu0 0.0
      %291 = vmatpush1.msra.mxu0 0.0
      %292 = vmatprep.subr.mxu0 0.0
      %293 = vmatpush1.msra.mxu0 0.0
      %294 = vmatprep.subr.mxu0 0.0
      %295 = vmatpush1.msra.mxu0 0.0
      %296 = vmatprep.subr.mxu0 0.0
      %297 = vmatpush1.msra.mxu0 0.0
      %298 = vmatprep.subr.mxu0 0.0
      %299 = vmatpush1.msra.mxu0 0.0
      %300 = vmatprep.subr.mxu0 0.0
      %301 = vmatpush1.msra.mxu0 0.0
      %302 = vmatprep.subr.mxu0 0.0
      %303 = vmatpush1.msra.mxu0 0.0
      %304 = vmatprep.subr.mxu0 0.0
      %305 = vmatpush1.msra.mxu0 0.0
      %306 = vmatprep.subr.mxu0 0.0
      %307 = vmatpush1.msra.mxu0 0.0
      %308 = vmatprep.subr.mxu0 0.0
      %309 = vmatpush1.msra.mxu0 0.0
      %310 = vmatprep.subr.mxu0 0.0
      %311 = vmatpush1.msra.mxu0 0.0
      %312 = vmatprep.subr.mxu0 0.0
      %313 = vmatpush1.msra.mxu0 0.0
      %314 = vmatprep.subr.mxu0 0.0
      %315 = vmatpush1.msra.mxu0 0.0
      %316 = vmatprep.subr.mxu0 0.0
      %317 = vmatpush1.msra.mxu0 0.0
      %318 = vmatprep.mubr.f32.mxu0 0.0
      %319 = vmatmul.mubr.f32.gmra.mrb[0].mxu0 %v207
      %v320 = vpop.f32.mrb[0].mxu0
      %v321 = vadd.f32 %v203, %v320
      %v322 = vpop.f32.mrb[0].mxu0
      %323 = vmatprep.mubr.f32.mxu0 0.0
      %324 = vmatmul.mubr.f32.gmra.mrb[0].mxu0 %v210
      %v325 = vpop.f32.mrb[0].mxu0
      %v326 = vadd.f32 %v203, %v325
      %v327 = vpop.f32.mrb[0].mxu0
      %328 = vmatprep.mubr.f32.mxu0 0.0
      %329 = vmatmul.mubr.f32.gmra.mrb[0].mxu0 %v213
      %v330 = vpop.f32.mrb[0].mxu0
      %v331 = vadd.f32 %v203, %v330
      %v332 = vpop.f32.mrb[0].mxu0
      %333 = vmatprep.mubr.f32.mxu0 0.0
      %334 = vmatmul.mubr.f32.gmra.mrb[0].mxu0 %v216
      %v335 = vpop.f32.mrb[0].mxu0
      %v336 = vadd.f32 %v203, %v335
      %v337 = vpop.f32.mrb[0].mxu0
      %338 = vmatprep.mubr.f32.mxu0 0.0
      %339 = vmatmul.mubr.f32.gmra.mrb[0].mxu0 %v219
      %v340 = vpop.f32.mrb[0].mxu0
      %v341 = vadd.f32 %v203, %v340
      %v342 = vpop.f32.mrb[0].mxu0
      %343 = vmatprep.mubr.f32.mxu0 0.0
      %344 = vmatmul.mubr.f32.gmra.mrb[0].mxu0 %v222
      %v345 = vpop.f32.mrb[0].mxu0
      %v346 = vadd.f32 %v203, %v345
      %v347 = vpop.f32.mrb[0].mxu0
      %348 = vmatprep.mubr.f32.mxu0 0.0
      %349 = vmatmul.mubr.f32.gmra.mrb[0].mxu0 %v225
      %v350 = vpop.f32.mrb[0].mxu0
      %v351 = vadd.f32 %v203, %v350
      %v352 = vpop.f32.mrb[0].mxu0
      %353 = vmatprep.mubr.f32.mxu0 0.0
      %354 = vmatmul.mubr.f32.gmra.mrb[0].mxu0 %v228
      %v355 = vpop.f32.mrb[0].mxu0
      %v356 = vadd.f32 %v203, %v355
      %v357 = vpop.f32.mrb[0].mxu0
      %358 = vmatprep.mubr.f32.mxu0 0.0
      %359 = vmatmul.mubr.f32.gmra.mrb[0].mxu0 %v231
      %v360 = vpop.f32.mrb[0].mxu0
      %v361 = vadd.f32 %v203, %v360
      %v362 = vpop.f32.mrb[0].mxu0
      %363 = vmatprep.mubr.f32.mxu0 0.0
      %364 = vmatmul.mubr.f32.gmra.mrb[0].mxu0 %v234
      %v365 = vpop.f32.mrb[0].mxu0
      %v366 = vadd.f32 %v203, %v365
      %v367 = vpop.f32.mrb[0].mxu0
      %368 = vmatprep.mubr.f32.mxu0 0.0
      %369 = vmatmul.mubr.f32.gmra.mrb[0].mxu0 %v237
      %v370 = vpop.f32.mrb[0].mxu0
      %v371 = vadd.f32 %v203, %v370
      %v372 = vpop.f32.mrb[0].mxu0
      %373 = vmatprep.mubr.f32.mxu0 0.0
      %374 = vmatmul.mubr.f32.gmra.mrb[0].mxu0 %v240
      %v375 = vpop.f32.mrb[0].mxu0
      %v376 = vadd.f32 %v203, %v375
      %v377 = vpop.f32.mrb[0].mxu0
      %378 = vmatprep.mubr.f32.mxu0 0.0
      %379 = vmatmul.mubr.f32.gmra.mrb[0].mxu0 %v243
      %v380 = vpop.f32.mrb[0].mxu0
      %v381 = vadd.f32 %v203, %v380
      %v382 = vpop.f32.mrb[0].mxu0
      %383 = vmatprep.mubr.f32.mxu0 0.0
      %384 = vmatmul.mubr.f32.gmra.mrb[0].mxu0 %v246
      %v385 = vpop.f32.mrb[0].mxu0
      %v386 = vadd.f32 %v203, %v385
      %v387 = vpop.f32.mrb[0].mxu0
      %388 = vmatprep.mubr.f32.mxu0 0.0
      %389 = vmatmul.mubr.f32.gmra.mrb[0].mxu0 %v249
      %v390 = vpop.f32.mrb[0].mxu0
      %v391 = vadd.f32 %v203, %v390
      %v392 = vpop.f32.mrb[0].mxu0
      %393 = vmatprep.mubr.f32.mxu0 0.0
      %394 = vmatmul.mubr.f32.gmra.mrb[0].mxu0 %v252
      %v395 = vpop.f32.mrb[0].mxu0
      %v396 = vadd.f32 %v203, %v395
      %v397 = vpop.f32.mrb[0].mxu0
      %398 = vdwg.mxu0
      %v399 = vmax.f32 %v321, 0.0
      %v400 = vmax.f32 %v326, 0.0
      %v401 = vmax.f32 %v331, 0.0
      %v402 = vmax.f32 %v336, 0.0
      %v403 = vmax.f32 %v341, 0.0
      %v404 = vmax.f32 %v346, 0.0
      %v405 = vmax.f32 %v351, 0.0
      %v406 = vmax.f32 %v356, 0.0
      %v407 = vmax.f32 %v361, 0.0
      %v408 = vmax.f32 %v366, 0.0
      %v409 = vmax.f32 %v371, 0.0
      %v410 = vmax.f32 %v376, 0.0
      %v411 = vmax.f32 %v381, 0.0
      %v412 = vmax.f32 %v386, 0.0
      %v413 = vmax.f32 %v391, 0.0
      %v414 = vmax.f32 %v396, 0.0
      %vm415 = vcmask 261120
      %416 = vst.msk [vmem:[%s172] sm:$0xff] %vm415, %v399
      %417 = vst.msk [vmem:[%s172 + $0x8] sm:$0xff] %vm415, %v400
      %418 = vst.msk [vmem:[%s172 + $0x10] sm:$0xff] %vm415, %v401
      %419 = vst.msk [vmem:[%s172 + $0x18] sm:$0xff] %vm415, %v402
      %420 = vst.msk [vmem:[%s172 + $0x20] sm:$0xff] %vm415, %v403
      %421 = vst.msk [vmem:[%s172 + $0x28] sm:$0xff] %vm415, %v404
      %422 = vst.msk [vmem:[%s172 + $0x30] sm:$0xff] %vm415, %v405
      %423 = vst.msk [vmem:[%s172 + $0x38] sm:$0xff] %vm415, %v406
      %424 = vst.msk [vmem:[%s172 + $0x40] sm:$0xff] %vm415, %v407
      %425 = vst.msk [vmem:[%s172 + $0x48] sm:$0xff] %vm415, %v408
      %426 = vst.msk [vmem:[%s172 + $0x50] sm:$0xff] %vm415, %v409
      %427 = vst.msk [vmem:[%s172 + $0x58] sm:$0xff] %vm415, %v410
      %428 = vst.msk [vmem:[%s172 + $0x60] sm:$0xff] %vm415, %v411
      %429 = vst.msk [vmem:[%s172 + $0x68] sm:$0xff] %vm415, %v412
      %430 = vst.msk [vmem:[%s172 + $0x70] sm:$0xff] %vm415, %v413
      %431 = vst.msk [vmem:[%s172 + $0x78] sm:$0xff] %vm415, %v414
      %s432 = smul.u32 16, %s14
      %p433 = scmp.lt.s32.totalorder %s432, 31
      %s434 = scalar_select %p433, %s432, 31
      %s435 = smul.addr %s434, 8
      %s436 = scalar_lea.vmem %s3, %s435
      // Predicated region
      $region33: #{tpu_custom_call.1} parent=31 // pred_check
        %p437 = pneg %p100
      $region34: #{tpu_custom_call.1} parent=31 // pred_check_branch
        %439 = sbr.rel (%p437) target = $region36
      $region35: #{tpu_custom_call.1} parent=31 // pred_region
        %s440 = smul.u32 16, %s14
      $region36: #{tpu_custom_call.1} parent=31 // pred_fallthru
        _
    $region32: #{tpu_custom_call.1} parent=5 // pred_fallthru
      _
    %p441 = scmp.le.s32.totalorder 2, %s9
    // Predicated region
    $region37: #{tpu_custom_call.1} parent=5 // pred_check
      %p442 = pneg %p441
    $region38: #{tpu_custom_call.1} parent=5 // pred_check_branch
      %444 = sbr.rel (%p442) target = $region40
    $region39: #{tpu_custom_call.1} parent=5 // pred_region
      %s445 = ssub.s32 %s9, 2
      // Predicated region
      $region41: #{tpu_custom_call.1} parent=39 // pred_check
        %p446 = pneg %p106
      $region42: #{tpu_custom_call.1} parent=39 // pred_check_branch
        %448 = sbr.rel (%p446) target = $region44
      $region43: #{tpu_custom_call.1} parent=39 // pred_region
        %s449 = smul.u32 16, %s15
        %p450 = scmp.lt.s32.totalorder %s449, 31
        %s451 = scalar_select %p450, %s449, 31
        %s452 = smul.addr %s451, 8
        %s453 = scalar_lea.vmem %s3, %s452
      $region44: #{tpu_custom_call.1} parent=39 // pred_fallthru
        _
    $region40: #{tpu_custom_call.1} parent=5 // pred_fallthru
      _
  $region6: #{tpu_custom_call.1} parent=0 // loop_footer
    %s13 = sadd.s32 1, %s9
  $region7: #{tpu_custom_call.1} parent=0 // loop_footer_branch
    %8 = sbr.rel target = $region3
  $region8: #{tpu_custom_call.1} parent=0 // loop_exit
    _

</llo_original>
